<compile_context>
chip_gen: v7x
topology: tpu7x:2x2x1
jax: 0.10.0
libtpu: 0.0.40
codegen_flags: <defaults>
</compile_context>

<pallas_src>
import jax
import jax.numpy as jnp
from jax.experimental import pallas as pl
from jax.experimental.pallas import tpu as pltpu


_CHUNK_TARGET_BYTES = 8 << 20   # start splitting the DMA above ~8 MiB
_MAX_DMA_CHUNKS = 4             # copies kept in flight on the DMA engines


def _chunk_bounds(dim0: int, total_bytes: int):
    """Static (start, size) ranges along axis 0 for the HBM->HBM DMA copy."""
    if dim0 <= 1 or total_bytes <= _CHUNK_TARGET_BYTES:
        return ((0, dim0),)
    n = min(_MAX_DMA_CHUNKS, dim0, max(2, total_bytes // _CHUNK_TARGET_BYTES))
    base, rem = divmod(dim0, n)
    bounds, start = [], 0
    for i in range(n):
        size = base + (1 if i < rem else 0)
        bounds.append((start, size))
        start += size
    return tuple(bounds)


def _make_dma_copy_kernel(bounds):
    """Kernel body: chunked HBM->HBM DMA copy, no VMEM staging."""

    def kernel(w_hbm, o_hbm, sems):
        copies = []
        if bounds is None:  # 0-d parameter: copy the whole ref
            copies.append(pltpu.make_async_copy(w_hbm, o_hbm, sems.at[0]))
        else:
            for idx, (start, size) in enumerate(bounds):
                copies.append(
                    pltpu.make_async_copy(
                        w_hbm.at[pl.ds(start, size)],
                        o_hbm.at[pl.ds(start, size)],
                        sems.at[idx],
                    )
                )
        for cp in copies:   # issue all DMAs (kept in flight in parallel)
            cp.start()
        for cp in copies:   # then drain them
            cp.wait()

    n_sems = 1 if bounds is None else len(bounds)
    return kernel, n_sems


def generated_image_pallas_copy(weight: jax.Array) -> jax.Array:
    """Explicitly materialize the image parameter into a fresh HBM buffer.

    Pure identity copy done entirely by the DMA engines (HBM -> HBM); works
    for any shape/dtype on v5e / v6e / v7x with no VMEM pressure.
    """
    itemsize = jnp.dtype(weight.dtype).itemsize
    total_bytes = weight.size * itemsize
    bounds = (
        _chunk_bounds(weight.shape[0], total_bytes) if weight.ndim >= 1 else None
    )
    kernel, n_sems = _make_dma_copy_kernel(bounds)

    return pl.pallas_call(
        kernel,
        out_shape=jax.ShapeDtypeStruct(weight.shape, weight.dtype),
        in_specs=[pl.BlockSpec(memory_space=pl.ANY)],
        out_specs=pl.BlockSpec(memory_space=pl.ANY),
        scratch_shapes=[pltpu.SemaphoreType.DMA((n_sems,))],
        cost_estimate=pl.CostEstimate(
            flops=0, transcendentals=0, bytes_accessed=2 * total_bytes
        ),
    )(weight)


def generated_image_forward(weight: jax.Array, *, materialize: bool = False) -> jax.Array:
    """Forward pass of GeneratedImage.

    PyTorch's forward() returns the parameter tensor itself; the exact (and
    fastest) equivalent is returning `weight` unchanged.  Pass
    materialize=True to force an explicit fresh-buffer copy via the Pallas
    HBM->HBM DMA kernel.
    """
    if not materialize:
        return weight
    return generated_image_pallas_copy(weight)


class GeneratedImage:
    """JAX counterpart of the PyTorch module: stores the image parameter."""

    def __init__(self, img_shape, key):
        # torch.rand -> uniform [0, 1); reproduced with JAX PRNG (distribution
        # matches; bit values differ from torch — only distribution matters).
        self.weight = jax.random.uniform(key, img_shape, dtype=jnp.float32)

    def __call__(self, materialize: bool = False):
        return generated_image_forward(self.weight, materialize=materialize)


if __name__ == "__main__":
    key = jax.random.PRNGKey(0)
    img_shape = (2, 4, 16, 16)  # small NCHW image, consistent with the module

    model = GeneratedImage(img_shape, key)

    # Default path: true no-op, identical to PyTorch returning the parameter.
    out = jax.block_until_ready(model())

    # Explicit Pallas materialization path (HBM->HBM DMA copy), run once.
    pallas_out = jax.block_until_ready(model(materialize=True))

    assert out.shape == img_shape and out.dtype == jnp.float32
    assert pallas_out.shape == img_shape and pallas_out.dtype == jnp.float32
    assert bool(jnp.array_equal(out, model.weight))
    assert bool(jnp.array_equal(pallas_out, model.weight))

    print("KERNEL_OK")
</pallas_src>

<mosaic_0001>
module attributes {stable_mosaic.version = 11 : i64} {
  func.func @kernel(%arg0: memref<2x4x16x16xf32, #tpu.memory_space<any>>, %arg1: memref<2x4x16x16xf32, #tpu.memory_space<any>>, %arg2: memref<1x!tpu.dma_semaphore, #tpu.memory_space<semaphore_mem>>) attributes {dimension_semantics = [], scalar_prefetch = 0 : i64, scratch_operands = 1 : i64, tpu.core_type = #tpu.core_type<tc>} {
    %c0_i32 = arith.constant 0 : i32
    %c0_i32_0 = arith.constant 0 : i32
    %c0_i32_1 = arith.constant 0 : i32
    %c0_i32_2 = arith.constant 0 : i32
    %c0_i32_3 = arith.constant 0 : i32
    %0 = tpu.memref_slice %arg0[%c0_i32_0, %c0_i32_1, %c0_i32_2, %c0_i32_3] : memref<2x4x16x16xf32, #tpu.memory_space<any>> -> memref<2x4x16x16xf32, #tpu.memory_space<any>>
    %c0_i32_4 = arith.constant 0 : i32
    %c0_i32_5 = arith.constant 0 : i32
    %c0_i32_6 = arith.constant 0 : i32
    %c0_i32_7 = arith.constant 0 : i32
    %1 = tpu.memref_slice %arg1[%c0_i32_4, %c0_i32_5, %c0_i32_6, %c0_i32_7] : memref<2x4x16x16xf32, #tpu.memory_space<any>> -> memref<2x4x16x16xf32, #tpu.memory_space<any>>
    %2 = tpu.memref_slice %arg2[%c0_i32] : memref<1x!tpu.dma_semaphore, #tpu.memory_space<semaphore_mem>> -> memref<1x!tpu.dma_semaphore, #tpu.memory_space<semaphore_mem>>
    %3 = tpu.memref_squeeze %2 : memref<1x!tpu.dma_semaphore, #tpu.memory_space<semaphore_mem>> -> memref<!tpu.dma_semaphore, #tpu.memory_space<semaphore_mem>>
    tpu.enqueue_dma source(%0 : memref<2x4x16x16xf32, #tpu.memory_space<any>>) target(%1 : memref<2x4x16x16xf32, #tpu.memory_space<any>>) target_semaphore(%3 : memref<!tpu.dma_semaphore, #tpu.memory_space<semaphore_mem>>)
    %c0_i32_8 = arith.constant 0 : i32
    %c0_i32_9 = arith.constant 0 : i32
    %c0_i32_10 = arith.constant 0 : i32
    %c0_i32_11 = arith.constant 0 : i32
    %c0_i32_12 = arith.constant 0 : i32
    %4 = tpu.memref_slice %arg0[%c0_i32_9, %c0_i32_10, %c0_i32_11, %c0_i32_12] : memref<2x4x16x16xf32, #tpu.memory_space<any>> -> memref<2x4x16x16xf32, #tpu.memory_space<any>>
    %c0_i32_13 = arith.constant 0 : i32
    %c0_i32_14 = arith.constant 0 : i32
    %c0_i32_15 = arith.constant 0 : i32
    %c0_i32_16 = arith.constant 0 : i32
    %5 = tpu.memref_slice %arg1[%c0_i32_13, %c0_i32_14, %c0_i32_15, %c0_i32_16] : memref<2x4x16x16xf32, #tpu.memory_space<any>> -> memref<2x4x16x16xf32, #tpu.memory_space<any>>
    %6 = tpu.memref_slice %arg2[%c0_i32_8] : memref<1x!tpu.dma_semaphore, #tpu.memory_space<semaphore_mem>> -> memref<1x!tpu.dma_semaphore, #tpu.memory_space<semaphore_mem>>
    %7 = tpu.memref_squeeze %6 : memref<1x!tpu.dma_semaphore, #tpu.memory_space<semaphore_mem>> -> memref<!tpu.dma_semaphore, #tpu.memory_space<semaphore_mem>>
    tpu.wait_dma2 semaphore(%7 : memref<!tpu.dma_semaphore, #tpu.memory_space<semaphore_mem>>) src(%4 : memref<2x4x16x16xf32, #tpu.memory_space<any>>) dst(%5 : memref<2x4x16x16xf32, #tpu.memory_space<any>>)
    return
  }
}

</mosaic_0001>

<llo_original>
// kernel: tpu_custom_call.1
$region0: #{tpu_custom_call.1}
  #allocation0 [shape = 'u32[]', space=smem, size = 0x4, offset = 0x4, fixed_abs, tag = 'smem constant byte address 0x4 - core index']
  #allocation1 [shape = 'u32[144,128]{1,0:T(1,128)}', space=vmem, size = 0x12000, scoped, tag = 'internal scratch']
  #allocation2 [shape = 's32[1]{0}', space=sflag, size = 0x4, scoped, tag = 'scratch operand']
  #allocation3 [shape = 's32[]', space=sflag, size = 0x4, offset = 0, fixed_abs, tag = 'sflag constant byte address 0x0 - dummy sync flag']
  #allocation4 [shape = 'u32[0]{0}', space=smem, size = 0, offset = 0, fixed_abs, tag = 'smem constant byte address 0x0 - null']
  %s0 = inlined_call_operand.hbm [shape: f32[2,4,16,16], index: 0, kind: input, shape index: {}]
  %s1 = inlined_call_operand.hbm [shape: f32[2,4,16,16], index: 1, kind: output, shape index: {}]
  %s2 = sld [smem:[#allocation0]]
  $region2: #{tpu_custom_call.1} parent=0
    _
  %s4 = ssub.s32 1, %s2
  %s5 = scalar_select 0, %s4, %s2
  %s7 = sshll.u32 1, 14
  %s8 = sxor.u32 4294967295, %s7
  %s11 = sshll.u32 3, 24
  %s12 = sxor.u32 4294967295, %s11
  %s13 = sand.u32 0, %s12
  %s15 = sor.u32 %s13, 0
  %18 = dma.general %s0, 2048, %s1, [#allocation2], [#allocation3], [#allocation4], %s15, 0
  %s19 = smul.u32 2, 4
  %s20 = smul.u32 %s19, 16
  %s21 = smul.u32 %s20, 1
  %s22 = sshll.u32 %s21, 4
  %23 = dma.done [#allocation2], %s22
  %24 = vsyncmov [#allocation2]
  %s25 = vpop.sfrf %24
  %p26 = scmp.eq.s32.totalorder %s25, 0
  %p27 = pneg %p26
  %29 = shalt.err (%p27)

</llo_original>
